<compile_context>
chip_gen: v7x
topology: tpu7x:2x2x1
jax: 0.10.0
libtpu: 0.0.40
codegen_flags: <defaults>
</compile_context>

<pallas_src>
import functools

import jax
import jax.numpy as jnp
from jax import lax
from jax.experimental import pallas as pl
from jax.experimental.pallas import tpu as pltpu


def _classifier_head_kernel(h_ref, w_ref, b_ref, logits_ref, emb_ref, acc_ref,
                            *, inv_s):
    """Streaming mean-pool over S + fused dense projection.

    h_ref:      [TB, TS, H]  hidden-state tile (f32 or bf16)
    w_ref:      [C, H]       linear weight, torch layout
    b_ref:      [1, C]       linear bias
    logits_ref: [TB, C]
    emb_ref:    [TB, H]
    acc_ref:    [TB, H] f32  running sum over the S grid axis
    """
    s = pl.program_id(1)

    @pl.when(s == 0)
    def _init():
        acc_ref[...] = jnp.zeros_like(acc_ref)

    # Convert fused into the reduction: no full-tile f32 temp, accumulation
    # stays f32 even for bf16 inputs.
    acc_ref[...] += jnp.sum(h_ref[...], axis=1, dtype=jnp.float32)  # [TB, H]

    @pl.when(s == pl.num_programs(1) - 1)
    def _finalize():
        emb = acc_ref[...] * inv_s                # mean over the TRUE S extent
        emb_ref[...] = emb.astype(emb_ref.dtype)  # dropout: identity (eval)
        # Contract H against H (weight kept in torch [C, H] layout, no .T).
        logits = lax.dot_general(
            emb, w_ref[...],
            dimension_numbers=(((1,), (1,)), ((), ())),
            preferred_element_type=jnp.float32)
        logits_ref[...] = (logits + b_ref[...]).astype(logits_ref.dtype)


def _pick_tile_pad(n, cap, align):
    """Pick a tile size <= cap for dimension n.

    Returns (tile, padded_n). Prefers an exact aligned divisor (padded_n == n);
    if n itself fits under cap the full dimension is used (always a legal
    block). Otherwise n is padded up to a multiple of an aligned tile so a
    pathological extent (e.g. a large prime S) never forces a full-dim block
    that could blow VMEM.
    """
    if n <= cap:
        return n, n                       # full dim: always a legal block shape
    for d in range(cap, align - 1, -1):
        if n % d == 0 and d % align == 0:
            return d, n
    t = max(align, (cap // align) * align)
    n_pad = -(-n // t) * t
    return t, n_pad


def classifier_head(hidden_states, weight, bias):
    """Mean-pool + linear head as a pipelined streaming reduction.

    hidden_states: [B, S, H] float32 or bfloat16
    weight:        [C, H]    float32  (torch nn.Linear layout, NOT transposed)
    bias:          [C]       float32
    returns (logits [B, C] f32, embeddings [B, H] f32)
    """
    B, S, H = hidden_states.shape
    C = weight.shape[0]
    itemsize = jnp.dtype(hidden_states.dtype).itemsize
    # Sublane alignment for the streamed operand: 8 (f32) / 16 (bf16) / 32 (8-bit).
    align_s = max(8, (8 * 4) // itemsize)

    # Generation-aware scoped-VMEM ceiling: ~96 MiB on 128-MiB chips (v5e/v6e),
    # ~48 MiB on 64-MiB chips (v7x).
    try:
        phys_vmem = int(pltpu.get_tpu_info().vmem_capacity_bytes)
    except Exception:
        phys_vmem = 64 << 20
    vmem_cap = int(min(phys_vmem * 3 // 4, 96 << 20))

    # Batch tile: whole batch when small; when B >= 16 force >= 2 batch grid
    # steps so the "parallel" axis can shard across v7x's two TensorCores.
    cap_b = 64 if B < 16 else min(64, max(8, B // 2))
    TB, B_pad = _pick_tile_pad(B, cap=cap_b, align=8)

    # Sequence tile: size the double-buffered streaming slab against the VMEM
    # ceiling, capped at 8 MiB per buffer (amortizes per-step overhead on all
    # generations without risking v7x OOM).
    fixed_bytes = (2 * (max(8, C) * max(128, H) * 4 + 8 * 128 * 4)  # weight+bias (2x)
                   + TB * H * 4                                      # accumulator
                   + 2 * TB * (H + C) * 4)                           # outputs (2x)
    stream_budget = min(8 << 20,
                        max(2 << 20, (vmem_cap - fixed_bytes - (2 << 20)) // 2))
    ts_cap = max(align_s, stream_budget // max(1, TB * H * itemsize))
    TS, S_pad = _pick_tile_pad(S, cap=min(S, ts_cap), align=align_s)

    # Zero-pad only in the pathological no-aligned-divisor case; zeros leave the
    # running sum unchanged (mean divides by the true S), padded batch rows are
    # sliced off below.
    if (B_pad, S_pad) != (B, S):
        hidden_states = jnp.pad(
            hidden_states, ((0, B_pad - B), (0, S_pad - S), (0, 0)))

    grid = (B_pad // TB, S_pad // TS)
    bias2d = bias.reshape(1, C)

    needed = (2 * TB * TS * H * itemsize   # double-buffered input stream
              + fixed_bytes                # weight/bias/outputs/accumulator
              + (2 << 20))                 # Mosaic internal scratch headroom
    vmem_limit = int(min(max(needed, 16 << 20), vmem_cap))

    kernel = functools.partial(_classifier_head_kernel, inv_s=float(1.0 / S))

    logits, embeddings = pl.pallas_call(
        kernel,
        out_shape=(
            jax.ShapeDtypeStruct((B_pad, C), jnp.float32),
            jax.ShapeDtypeStruct((B_pad, H), jnp.float32),
        ),
        grid_spec=pltpu.PrefetchScalarGridSpec(
            num_scalar_prefetch=0,
            grid=grid,
            in_specs=[
                pl.BlockSpec((TB, TS, H), lambda b, s: (b, s, 0)),
                pl.BlockSpec((C, H), lambda b, s: (0, 0)),
                pl.BlockSpec((1, C), lambda b, s: (0, 0)),
            ],
            out_specs=[
                pl.BlockSpec((TB, C), lambda b, s: (b, 0)),
                pl.BlockSpec((TB, H), lambda b, s: (b, 0)),
            ],
            scratch_shapes=[pltpu.VMEM((TB, H), jnp.float32)],
        ),
        compiler_params=pltpu.CompilerParams(
            dimension_semantics=("parallel", "arbitrary"),
            vmem_limit_bytes=vmem_limit,
        ),
    )(hidden_states, weight, bias2d)

    if B_pad != B:
        logits = logits[:B]
        embeddings = embeddings[:B]
    return logits, embeddings


def binary_classifier_forward(hidden_states, all_hidden_states, weight, bias):
    """Full forward of the PyTorch module (minus the untranslated encoder).

    weight: [C, H] as in torch.nn.Linear (used directly, no transpose).
    Returns (logits, embeddings, all_hidden_states), matching the module.
    """
    logits, embeddings = classifier_head(hidden_states, weight, bias)
    return logits, embeddings, all_hidden_states


if __name__ == "__main__":
    # Small shapes consistent with the module:
    # batch=2, seq=8, hidden=32, num_classes=2 (binary classifier).
    B, S, H, C = 2, 8, 32, 2

    key = jax.random.PRNGKey(0)
    k_h, k_w, k_b, k_hs1 = jax.random.split(key, 4)

    # Synthetic encoder outputs (out[0] and out[2]).
    hidden_states = jax.random.normal(k_h, (B, S, H), dtype=jnp.float32)
    all_hidden_states = (
        jax.random.normal(k_hs1, (B, S, H), dtype=jnp.float32),
        hidden_states,
    )

    # Deterministic nn.Linear(H, C) parameters (torch layout: weight [C, H]).
    bound = 1.0 / (H ** 0.5)
    weight = jax.random.uniform(k_w, (C, H), dtype=jnp.float32,
                                minval=-bound, maxval=bound)
    bias = jax.random.uniform(k_b, (C,), dtype=jnp.float32,
                              minval=-bound, maxval=bound)

    logits, embeddings, hs = binary_classifier_forward(
        hidden_states, all_hidden_states, weight, bias)
    jax.block_until_ready((logits, embeddings))

    # Pure-JAX reference check.
    emb_ref = jnp.mean(hidden_states, axis=1)
    logits_ref = emb_ref @ weight.T + bias
    assert jnp.allclose(embeddings, emb_ref, atol=1e-5, rtol=1e-5)
    assert jnp.allclose(logits, logits_ref, atol=1e-5, rtol=1e-5)
    assert logits.shape == (B, C) and embeddings.shape == (B, H)

    print("KERNEL_OK")
</pallas_src>

<mosaic_0001>
module attributes {stable_mosaic.version = 11 : i64} {
  func.func @_classifier_head_kernel(%arg0: i32, %arg1: i32, %arg2: memref<2x8x32xf32, #tpu.memory_space<vmem>>, %arg3: memref<2x32xf32, #tpu.memory_space<vmem>>, %arg4: memref<1x2xf32, #tpu.memory_space<vmem>>, %arg5: memref<2x2xf32, #tpu.memory_space<vmem>>, %arg6: memref<2x32xf32, #tpu.memory_space<vmem>>, %arg7: memref<2x32xf32, #tpu.memory_space<vmem>>) attributes {dimension_semantics = [#tpu.dimension_semantics<parallel>, #tpu.dimension_semantics<arbitrary>], iteration_bounds = array<i64: 1, 1>, scalar_prefetch = 0 : i64, scratch_operands = 1 : i64, tpu.core_type = #tpu.core_type<tc>, window_params = [{transform_indices = @transform_0, window_bounds = array<i64: 2, 8, 32>}, {pipeline_mode = #tpu.pipeline_mode<synchronous>, transform_indices = @transform_1, window_bounds = array<i64: 2, 32>}, {pipeline_mode = #tpu.pipeline_mode<synchronous>, transform_indices = @transform_2, window_bounds = array<i64: 1, 2>}, {transform_indices = @transform_3, window_bounds = array<i64: 2, 2>}, {transform_indices = @transform_4, window_bounds = array<i64: 2, 32>}]} {
    %c0_i32 = arith.constant 0 : i32
    %0 = arith.cmpi eq, %arg1, %c0_i32 : i32
    %1 = arith.extui %0 : i1 to i32
    %c0_i32_0 = arith.constant 0 : i32
    %2 = arith.cmpi ne, %1, %c0_i32_0 : i32
    scf.if %2 {
      %cst_9 = arith.constant 0.000000e+00 : f32
      %11 = vector.broadcast %cst_9 : f32 to vector<2x32xf32>
      %c0_10 = arith.constant 0 : index
      %c0_11 = arith.constant 0 : index
      %12 = vector.load %arg7[%c0_10, %c0_11] : memref<2x32xf32, #tpu.memory_space<vmem>>, vector<2x32xf32>
      tpu.vector_store %arg7[%c0_10, %c0_11], %11 {strides = array<i32>} : memref<2x32xf32, #tpu.memory_space<vmem>>, vector<2x32xf32>,
    } else {
    }
    %c0 = arith.constant 0 : index
    %c0_1 = arith.constant 0 : index
    %3 = vector.load %arg7[%c0, %c0_1] : memref<2x32xf32, #tpu.memory_space<vmem>>, vector<2x32xf32>
    %c0_2 = arith.constant 0 : index
    %c0_3 = arith.constant 0 : index
    %c0_4 = arith.constant 0 : index
    %4 = vector.load %arg2[%c0_2, %c0_3, %c0_4] : memref<2x8x32xf32, #tpu.memory_space<vmem>>, vector<2x8x32xf32>
    %cst = arith.constant dense<0.000000e+00> : vector<2x32xf32>
    %5 = vector.multi_reduction <add>, %4, %cst [1] : vector<2x8x32xf32> to vector<2x32xf32>
    %6 = arith.addf %3, %5 : vector<2x32xf32>
    %c0_5 = arith.constant 0 : index
    %c0_6 = arith.constant 0 : index
    %7 = vector.load %arg7[%c0_5, %c0_6] : memref<2x32xf32, #tpu.memory_space<vmem>>, vector<2x32xf32>
    tpu.vector_store %arg7[%c0_5, %c0_6], %6 {strides = array<i32>} : memref<2x32xf32, #tpu.memory_space<vmem>>, vector<2x32xf32>,
    %c0_i32_7 = arith.constant 0 : i32
    %8 = arith.cmpi eq, %arg1, %c0_i32_7 : i32
    %9 = arith.extui %8 : i1 to i32
    %c0_i32_8 = arith.constant 0 : i32
    %10 = arith.cmpi ne, %9, %c0_i32_8 : i32
    scf.if %10 {
      %c0_9 = arith.constant 0 : index
      %c0_10 = arith.constant 0 : index
      %11 = vector.load %arg7[%c0_9, %c0_10] : memref<2x32xf32, #tpu.memory_space<vmem>>, vector<2x32xf32>
      %cst_11 = arith.constant 1.250000e-01 : f32
      %12 = vector.broadcast %cst_11 : f32 to vector<2x32xf32>
      %13 = arith.mulf %11, %12 : vector<2x32xf32>
      %c0_12 = arith.constant 0 : index
      %c0_13 = arith.constant 0 : index
      %14 = vector.load %arg6[%c0_12, %c0_13] : memref<2x32xf32, #tpu.memory_space<vmem>>, vector<2x32xf32>
      tpu.vector_store %arg6[%c0_12, %c0_13], %13 {strides = array<i32>} : memref<2x32xf32, #tpu.memory_space<vmem>>, vector<2x32xf32>,
      %c0_14 = arith.constant 0 : index
      %c0_15 = arith.constant 0 : index
      %15 = vector.load %arg3[%c0_14, %c0_15] : memref<2x32xf32, #tpu.memory_space<vmem>>, vector<2x32xf32>
      %cst_16 = arith.constant dense<0.000000e+00> : vector<2x2xf32>
      %16 = tpu.matmul %13, %15, %cst_16 {dimension_numbers = #tpu.dot_dimension_numbers<[1], [1], [0], [0], [0, 0, 1, 0], [], []>} : vector<2x32xf32>, vector<2x32xf32>, vector<2x2xf32> -> vector<2x2xf32>
      %c0_17 = arith.constant 0 : index
      %c0_18 = arith.constant 0 : index
      %17 = vector.load %arg4[%c0_17, %c0_18] : memref<1x2xf32, #tpu.memory_space<vmem>>, vector<1x2xf32>
      %18 = vector.broadcast %17 : vector<1x2xf32> to vector<2x2xf32>
      %19 = arith.addf %16, %18 : vector<2x2xf32>
      %c0_19 = arith.constant 0 : index
      %c0_20 = arith.constant 0 : index
      %20 = vector.load %arg5[%c0_19, %c0_20] : memref<2x2xf32, #tpu.memory_space<vmem>>, vector<2x2xf32>
      tpu.vector_store %arg5[%c0_19, %c0_20], %19 {strides = array<i32>} : memref<2x2xf32, #tpu.memory_space<vmem>>, vector<2x2xf32>,
    } else {
    }
    return
  }
  func.func @transform_0(%arg0: i32, %arg1: i32) -> (i32, i32, i32) {
    %c0_i32 = arith.constant 0 : i32
    %c0_i32_0 = arith.constant 0 : i32
    return %arg0, %arg1, %c0_i32 : i32, i32, i32
  }
  func.func @transform_1(%arg0: i32, %arg1: i32) -> (i32, i32) {
    %c0_i32 = arith.constant 0 : i32
    %c0_i32_0 = arith.constant 0 : i32
    %c0_i32_1 = arith.constant 0 : i32
    return %c0_i32, %c0_i32_0 : i32, i32
  }
  func.func @transform_2(%arg0: i32, %arg1: i32) -> (i32, i32) {
    %c0_i32 = arith.constant 0 : i32
    %c0_i32_0 = arith.constant 0 : i32
    %c0_i32_1 = arith.constant 0 : i32
    return %c0_i32, %c0_i32_0 : i32, i32
  }
  func.func @transform_3(%arg0: i32, %arg1: i32) -> (i32, i32) {
    %c0_i32 = arith.constant 0 : i32
    %c0_i32_0 = arith.constant 0 : i32
    return %arg0, %c0_i32 : i32, i32
  }
  func.func @transform_4(%arg0: i32, %arg1: i32) -> (i32, i32) {
    %c0_i32 = arith.constant 0 : i32
    %c0_i32_0 = arith.constant 0 : i32
    return %arg0, %c0_i32 : i32, i32
  }
}

</mosaic_0001>

<llo_original>
// kernel: tpu_custom_call.1
$region0: #{tpu_custom_call.1}
  #allocation0 [shape = 'u32[]', space=smem, size = 0x4, offset = 0x4, fixed_abs, tag = 'smem constant byte address 0x4 - core index']
  #allocation1 [shape = 'u32[144,128]{1,0:T(1,128)}', space=vmem, size = 0x12000, scoped, tag = 'internal scratch']
  #allocation2 [shape = 'f32[2,32]{1,0:T(2,128)}', space=vmem, size = 0x400, scoped, tag = 'scratch operand']
  %s0 = inlined_call_operand.hbm [shape: f32[2,8,32], index: 0, kind: input, shape index: {}]
  %s1 = inlined_call_operand.vmem [shape: f32[2,32], index: 1, kind: input, shape index: {}]
  %s2 = inlined_call_operand.vmem [shape: f32[1,2], index: 2, kind: input, shape index: {}]
  %s3 = inlined_call_operand.hbm [shape: f32[2,2], index: 3, kind: output, shape index: {0}]
  %s4 = inlined_call_operand.hbm [shape: f32[2,32], index: 4, kind: output, shape index: {1}]
  %5 = xla_tuple %s3, %s4
  %s6 = sld [smem:[#allocation0]]
  $region42: #{tpu_custom_call.1} parent=0
    _
  %s8 = ssub.s32 1, %s6
  %s9 = scalar_select 0, %s8, %s6
  $region1: #{tpu_custom_call.1} parent=0
    #allocation3 [shape = 'u8[8192]{0}', space=vmem, size = 0x2000, scoped, tag = 'input window, operand 0, single buffered']
    #allocation4 [shape = 's32[1]{0}', space=sflag, size = 0x4, scoped, tag = 'scoped memory for tpu_custom_call.1']
    #allocation5 [shape = 's32[1]{0}', space=sflag, size = 0x4, scoped, tag = 'scoped memory for tpu_custom_call.1']
    #allocation6 [shape = 'u8[1024]{0}', space=vmem, size = 0x400, scoped, tag = 'output window, operand 0, single buffered']
    #allocation7 [shape = 'u8[1024]{0}', space=vmem, size = 0x400, scoped, tag = 'output window, operand 1, single buffered']
    #allocation8 [shape = 's32[1]{0}', space=sflag, size = 0x4, scoped, tag = 'scoped memory for tpu_custom_call.1']
    %10 = vsyncpa [#allocation4], 0
    %11 = vsyncpa [#allocation5], 0
    %12 = vsyncpa [#allocation8], 0
    // Predicated region
    $region2: #{tpu_custom_call.1} parent=1 // pred_check
      _
    $region3: #{tpu_custom_call.1} parent=1 // pred_check_branch
      %14 = sbr.rel (0) target = $region5
    $region4: #{tpu_custom_call.1} parent=1 // pred_region
      %s16 = ssub.s32 256, 256
      %17 = vsyncadd [#allocation4], %s16
      %s18 = sshll.u32 [#allocation3], 4
      %s19 = int_to_ptr.vmem [resolvable:$true] %s18
      %24 = dma.hbm_to_vmem [thread:$0]  %s0, 256, %s19, [#allocation4], 128, 128, 8
    $region5: #{tpu_custom_call.1} parent=1 // pred_fallthru
      _
    // Predicated region
    $region6: #{tpu_custom_call.1} parent=1 // pred_check
      _
    $region7: #{tpu_custom_call.1} parent=1 // pred_check_branch
      %26 = sbr.rel (0) target = $region9
    $region8: #{tpu_custom_call.1} parent=1 // pred_region
      _
    $region9: #{tpu_custom_call.1} parent=1 // pred_fallthru
      _
    // Predicated region
    $region10: #{tpu_custom_call.1} parent=1 // pred_check
      _
    $region11: #{tpu_custom_call.1} parent=1 // pred_check_branch
      %28 = sbr.rel (0) target = $region13
    $region12: #{tpu_custom_call.1} parent=1 // pred_region
      _
    $region13: #{tpu_custom_call.1} parent=1 // pred_fallthru
      _
    // Predicated region
    $region14: #{tpu_custom_call.1} parent=1 // pred_check
      _
    $region15: #{tpu_custom_call.1} parent=1 // pred_check_branch
      %30 = sbr.rel (0) target = $region17
    $region16: #{tpu_custom_call.1} parent=1 // pred_region
      %31 = dma.done [#allocation4], 256
    $region17: #{tpu_custom_call.1} parent=1 // pred_fallthru
      _
    %p32 = scmp.eq.s32.totalorder 0, 0
    // Predicated region
    $region18: #{tpu_custom_call.1} parent=1 // pred_check
      %p33 = pneg %p32
    $region19: #{tpu_custom_call.1} parent=1 // pred_check_branch
      %35 = sbr.rel (%p33) target = $region21
    $region20: #{tpu_custom_call.1} parent=1 // pred_region
      %vm36 = vcmask 254976
      %37 = vst.msk [vmem:[#allocation2] sm:$0x3] %vm36, 0.0
    $region21: #{tpu_custom_call.1} parent=1 // pred_fallthru
      _
    %v38 = vld [vmem:[#allocation2] sm:$0x3]
    %v39 = vld [vmem:[#allocation3] sm:$0xff]
    %v40 = vld [vmem:[#allocation3 + $0x8] sm:$0xff]
    %vm41 = vcmask 261120
    %v42 = vsel %vm41, %v39, 0.0
    %v43 = vrot.slane %v42, 4
    %v44 = vadd.f32 %v42, %v43
    %v45 = vrot.slane %v44, 2
    %v46 = vadd.f32 %v44, %v45
    %v47 = vrot.slane %v46, 1
    %v48 = vadd.f32 %v46, %v47
    %v49 = vsel %vm41, %v40, 0.0
    %v50 = vrot.slane %v49, 4
    %v51 = vadd.f32 %v49, %v50
    %v52 = vrot.slane %v51, 2
    %v53 = vadd.f32 %v51, %v52
    %v54 = vrot.slane %v53, 1
    %v55 = vadd.f32 %v53, %v54
    %vm58 = vcmask 1041409
    %v59 = vsel %vm58, %v55, %v48
    %v61 = vadd.f32 %v38, %v59
    %vm62 = vcmask 254976
    %63 = vst.msk [vmem:[#allocation2] sm:$0x3] %vm62, %v61
    // Predicated region
    $region22: #{tpu_custom_call.1} parent=1 // pred_check
      %p64 = pneg %p32
    $region23: #{tpu_custom_call.1} parent=1 // pred_check_branch
      %66 = sbr.rel (%p64) target = $region25
    $region24: #{tpu_custom_call.1} parent=1 // pred_region
      %v67 = vld [vmem:[#allocation2] sm:$0x3]
      %v68 = vmul.f32 %v67, 0.125
      %69 = vst.msk [vmem:[#allocation7] sm:$0x3] %vm62, %v68
      %v70 = vld [vmem:[%s1] sm:$0x3]
      %v71 = vld [vmem:[%s2] sm:$0x1]
      %v73 = vlaneseq
      %v74 = vshrl.u32 %v73, 7
      %v75 = vsub.s32 0, %v74
      %v76 = vrot.slane %v71, %v75
      %v79 = vsel %vm41, %v68, 0
      %v82 = vsel %vm41, %v70, 0
      %84 = vmatprep.subr.mxu0 0.0
      %85 = vmatpush1.xpose.msra.mxu0 %v82
      %86 = vmatprep.subr.mxu0 0.0
      %87 = vmatpush1.xpose.msra.mxu0 0.0
      %88 = vmatprep.subr.mxu0 0.0
      %89 = vmatpush1.xpose.msra.mxu0 0.0
      %90 = vmatprep.subr.mxu0 0.0
      %91 = vmatpush1.xpose.msra.mxu0 0.0
      %92 = vmatprep.subr.mxu0 0.0
      %93 = vmatpush1.xpose.msra.mxu0 0.0
      %94 = vmatprep.subr.mxu0 0.0
      %95 = vmatpush1.xpose.msra.mxu0 0.0
      %96 = vmatprep.subr.mxu0 0.0
      %97 = vmatpush1.xpose.msra.mxu0 0.0
      %98 = vmatprep.subr.mxu0 0.0
      %99 = vmatpush1.xpose.msra.mxu0 0.0
      %100 = vmatprep.subr.mxu0 0.0
      %101 = vmatpush1.xpose.msra.mxu0 0.0
      %102 = vmatprep.subr.mxu0 0.0
      %103 = vmatpush1.xpose.msra.mxu0 0.0
      %104 = vmatprep.subr.mxu0 0.0
      %105 = vmatpush1.xpose.msra.mxu0 0.0
      %106 = vmatprep.subr.mxu0 0.0
      %107 = vmatpush1.xpose.msra.mxu0 0.0
      %108 = vmatprep.subr.mxu0 0.0
      %109 = vmatpush1.xpose.msra.mxu0 0.0
      %110 = vmatprep.subr.mxu0 0.0
      %111 = vmatpush1.xpose.msra.mxu0 0.0
      %112 = vmatprep.subr.mxu0 0.0
      %113 = vmatpush1.xpose.msra.mxu0 0.0
      %114 = vmatprep.subr.mxu0 0.0
      %115 = vmatpush1.xpose.msra.mxu0 0.0
      %116 = vmatprep.subr.mxu0 0.0
      %117 = vmatpush1.xpose.msra.mxu0 0.0
      %118 = vmatprep.subr.mxu0 0.0
      %119 = vmatpush1.xpose.msra.mxu0 0.0
      %120 = vmatprep.subr.mxu0 0.0
      %121 = vmatpush1.xpose.msra.mxu0 0.0
      %122 = vmatprep.subr.mxu0 0.0
      %123 = vmatpush1.xpose.msra.mxu0 0.0
      %124 = vmatprep.subr.mxu0 0.0
      %125 = vmatpush1.xpose.msra.mxu0 0.0
      %126 = vmatprep.subr.mxu0 0.0
      %127 = vmatpush1.xpose.msra.mxu0 0.0
      %128 = vmatprep.subr.mxu0 0.0
      %129 = vmatpush1.xpose.msra.mxu0 0.0
      %130 = vmatprep.subr.mxu0 0.0
      %131 = vmatpush1.xpose.msra.mxu0 0.0
      %132 = vmatprep.subr.mxu0 0.0
      %133 = vmatpush1.xpose.msra.mxu0 0.0
      %134 = vmatprep.subr.mxu0 0.0
      %135 = vmatpush1.xpose.msra.mxu0 0.0
      %136 = vmatprep.subr.mxu0 0.0
      %137 = vmatpush1.xpose.msra.mxu0 0.0
      %138 = vmatprep.subr.mxu0 0.0
      %139 = vmatpush1.xpose.msra.mxu0 0.0
      %140 = vmatprep.subr.mxu0 0.0
      %141 = vmatpush1.xpose.msra.mxu0 0.0
      %142 = vmatprep.subr.mxu0 0.0
      %143 = vmatpush1.xpose.msra.mxu0 0.0
      %144 = vmatprep.subr.mxu0 0.0
      %145 = vmatpush1.xpose.msra.mxu0 0.0
      %146 = vmatprep.subr.mxu0 0.0
      %147 = vmatpush1.xpose.msra.mxu0 0.0
      %148 = vmatprep.mubr.f32.mxu0 0.0
      %149 = vmatmul.mubr.f32.gmra.mrb[0].mxu0 %v79
      %v150 = vpop.f32.mrb[0].mxu0
      %v151 = vadd.f32 %v76, %v150
      %v152 = vpop.f32.mrb[0].mxu0
      %153 = vdwg.mxu0
      %vm154 = vcmask 9216
      %155 = vst.msk [vmem:[#allocation6] sm:$0x3] %vm154, %v151
    $region25: #{tpu_custom_call.1} parent=1 // pred_fallthru
      _
    // Predicated region
    $region26: #{tpu_custom_call.1} parent=1 // pred_check
      _
    $region27: #{tpu_custom_call.1} parent=1 // pred_check_branch
      %157 = sbr.rel (0) target = $region29
    $region28: #{tpu_custom_call.1} parent=1 // pred_region
      %s159 = ssub.s32 32, 32
      %160 = vsyncadd [#allocation5], %s159
      %s162 = sshll.u32 [#allocation6], 4
      %s163 = int_to_ptr.vmem [resolvable:$true] %s162
      %165 = dma.vmem_to_hbm [thread:$0]  %s163, 32, %s3, [#allocation5]
    $region29: #{tpu_custom_call.1} parent=1 // pred_fallthru
      _
    // Predicated region
    $region30: #{tpu_custom_call.1} parent=1 // pred_check
      _
    $region31: #{tpu_custom_call.1} parent=1 // pred_check_branch
      %167 = sbr.rel (0) target = $region33
    $region32: #{tpu_custom_call.1} parent=1 // pred_region
      %s169 = ssub.s32 32, 32
      %170 = vsyncadd [#allocation8], %s169
      %s172 = sshll.u32 [#allocation7], 4
      %s173 = int_to_ptr.vmem [resolvable:$true] %s172
      %175 = dma.vmem_to_hbm [thread:$0]  %s173, 32, %s4, [#allocation8]
    $region33: #{tpu_custom_call.1} parent=1 // pred_fallthru
      _
    // Predicated region
    $region34: #{tpu_custom_call.1} parent=1 // pred_check
      _
    $region35: #{tpu_custom_call.1} parent=1 // pred_check_branch
      %177 = sbr.rel (0) target = $region37
    $region36: #{tpu_custom_call.1} parent=1 // pred_region
      %178 = dma.done [#allocation5], 32
    $region37: #{tpu_custom_call.1} parent=1 // pred_fallthru
      _
    // Predicated region
    $region38: #{tpu_custom_call.1} parent=1 // pred_check
      _
    $region39: #{tpu_custom_call.1} parent=1 // pred_check_branch
      %180 = sbr.rel (0) target = $region41
    $region40: #{tpu_custom_call.1} parent=1 // pred_region
      %181 = dma.done [#allocation8], 32
    $region41: #{tpu_custom_call.1} parent=1 // pred_fallthru
      _
    %182 = vsyncpa [#allocation4], 1
    %183 = vsyncpa [#allocation5], 1
    %184 = vsyncpa [#allocation8], 1

</llo_original>
